<compile_context>
chip_gen: v7x
topology: tpu7x:2x2x1
jax: 0.10.0
libtpu: 0.0.40
codegen_flags: <defaults>
</compile_context>

<pallas_src>
import jax
import jax.numpy as jnp
from jax.experimental import pallas as pl
from jax.experimental.pallas import tpu as pltpu

_SUBLANE = 8  # pad num_hops to a sublane multiple (NOT 128 lanes)


def _attention_kernel(x_ref, w1_ref, w2k_ref, o_ref):
    # x_ref:   (Bt*S, H)  float32  -- Bt batch elements, rows flattened
    # w1_ref:  (H, A)     bfloat16 -- w1^T
    # w2k_ref: (Kp, A)    bfloat16 -- w2 padded on hops to Kp (multiple of 8)
    # o_ref:   (Bt, Kp, S) float32 -- hops on sublanes, seq on lanes
    Bt, Kp, S = o_ref.shape

    # ---- MXU in bf16, f32 accumulate (tall M = Bt*S rows) -------------------
    xb = x_ref[...].astype(jnp.bfloat16)                       # VPU cast, cheap
    h = jnp.tanh(jnp.dot(xb, w1_ref[...],
                         preferred_element_type=jnp.float32))  # (Bt*S, A) f32
    logits = jnp.dot(h.astype(jnp.bfloat16), w2k_ref[...].T,
                     preferred_element_type=jnp.float32)       # (Bt*S, Kp) f32

    # ---- move hops to sublanes / seq to lanes -------------------------------
    # reshape splits the row (major) axis -> free when S % 8 == 0;
    # the (0,2,1) transpose is the standard last-two-dims XLU transpose and
    # only touches the small logits tensor.
    logits = jnp.transpose(logits.reshape(Bt, S, Kp), (0, 2, 1))  # (Bt, Kp, S)

    # ---- softmax over the sequence axis (now the lane axis), exact ----------
    m = jnp.max(logits, axis=-1, keepdims=True)                # (Bt, Kp, 1)
    e = jnp.exp(logits - m)                                    # (Bt, Kp, S)
    d = jnp.sum(e, axis=-1, keepdims=True)                     # (Bt, Kp, 1)
    # Exact normalization (rows sum to 1 within f32 rounding).  The previous
    # approx-EUP reciprocal violated the sum-to-1 check downstream.
    o_ref[...] = (e / d).astype(o_ref.dtype)


def prepare_params(w1, w2, sublane=_SUBLANE):
    """One-time parameter prep (hoisted out of the per-call hot path).

    Args:
      w1: (A, H)  -- nn.Linear(hidden_dim, att_hidden_dim).weight
      w2: (K, A)  -- nn.Linear(att_hidden_dim, num_hops).weight
    Returns:
      w1t: (H, A)  bf16, transposed w1
      w2k: (Kp, A) bf16, w2 zero-padded on the hop axis to a multiple of 8
    """
    A, H = w1.shape
    K, A2 = w2.shape
    assert A == A2
    Kp = ((K + sublane - 1) // sublane) * sublane
    w1t = jnp.transpose(w1).astype(jnp.bfloat16)                          # (H, A)
    w2k = jnp.zeros((Kp, A), dtype=jnp.bfloat16).at[:K, :].set(
        w2.astype(jnp.bfloat16))                                          # (Kp, A)
    return w1t, w2k


def _default_batch_block(B, S, H, A, Kp, budget_bytes=4 << 20):
    """Largest divisor of B that (a) leaves >=2 grid steps when B>1 and
    (b) keeps the per-step VMEM footprint under `budget_bytes`
    (double-buffered x & out blocks + h/logits/e temporaries)."""
    def step_bytes(bt):
        n = bt * S
        x_io = 2 * n * H * 4            # double-buffered f32 x block
        out_io = 2 * bt * Kp * S * 4    # double-buffered f32 out block
        tmp = n * A * 4 + 3 * bt * Kp * S * 4
        return x_io + out_io + tmp

    best = 1
    for bt in range(1, B + 1):
        if B % bt:
            continue
        if B > 1 and (B // bt) < 2:     # keep >=2 grid steps (overlap + 2 TCs)
            continue
        if step_bytes(bt) <= budget_bytes:
            best = bt
    return best


def attention_0(x, w1t, w2k, num_hops, *, batch_block=None):
    """
    Args:
      x:        (B, S, H) float32
      w1t:      (H, A)    bf16, from prepare_params
      w2k:      (Kp, A)   bf16, hop-padded, from prepare_params
      num_hops: K, true number of attention hops
      batch_block: batch elements per grid step (must divide B).
    Returns:
      (B, S, K) float32 attention weights, softmax over S.
    """
    B, S, H = x.shape
    Ha, A = w1t.shape
    Kp, A2 = w2k.shape
    assert Ha == H and A == A2 and num_hops <= Kp

    if batch_block is None:
        batch_block = _default_batch_block(B, S, H, A, Kp)
    assert B % batch_block == 0, "batch_block must divide B"
    grid = (B // batch_block,)

    # Flatten x in the wrapper (free reshape); kernel blocks rows in multiples of S.
    xf = x.reshape(B * S, H)

    flops = 2 * B * S * (H * A + A * Kp)
    transcendentals = B * S * (A + Kp)          # tanh + exp
    bytes_accessed = (B * S * H * 4             # x read (f32)
                      + (H * A + Kp * A) * 2    # bf16 weights
                      + B * Kp * S * 4)         # out write (f32)

    out_t = pl.pallas_call(
        _attention_kernel,
        out_shape=jax.ShapeDtypeStruct((B, Kp, S), jnp.float32),
        grid_spec=pltpu.PrefetchScalarGridSpec(
            num_scalar_prefetch=0,
            grid=grid,
            in_specs=[
                pl.BlockSpec((batch_block * S, H), lambda i: (i, 0)),
                # Constant-index weight blocks (tiny; would be Buffered(1) at scale).
                pl.BlockSpec((H, A), lambda i: (0, 0)),
                pl.BlockSpec((Kp, A), lambda i: (0, 0)),
            ],
            out_specs=pl.BlockSpec((batch_block, Kp, S), lambda i: (i, 0, 0)),
        ),
        compiler_params=pltpu.CompilerParams(
            # Batch-block axis is independent -> shards across both v7x TCs and
            # pipelines HBM<->VMEM DMAs against compute across grid steps.
            dimension_semantics=("parallel",),
        ),
        cost_estimate=pl.CostEstimate(
            flops=flops,
            transcendentals=transcendentals,
            bytes_accessed=bytes_accessed,
        ),
    )(xf, w1t, w2k)

    # Hops back to the last axis and drop the small sublane padding.  The
    # padded hop rows hold 1/S (softmax of zero logits) and must never be
    # consumed directly -- always go through this slice.
    return jnp.transpose(out_t, (0, 2, 1))[:, :, :num_hops]


def attention_0_ref(x, w1, w2):
    """Pure-JAX f32 reference for correctness checking."""
    out = jnp.tanh(jnp.einsum("bsh,ah->bsa", x, w1))
    out = jnp.einsum("bsa,ka->bsk", out, w2)
    return jax.nn.softmax(out, axis=1)


if __name__ == "__main__":
    # Small shapes consistent with the module's forward:
    #   batch=2, seq_len=8, hidden_dim=32, att_hidden_dim=16, num_hops=4
    B, S, H, A, K = 2, 8, 32, 16, 4

    key = jax.random.PRNGKey(0)
    kx, kw1, kw2 = jax.random.split(key, 3)

    x = jax.random.normal(kx, (B, S, H), dtype=jnp.float32)
    # nn.Linear weight shapes: (out_features, in_features)
    w1 = jax.random.normal(kw1, (A, H), dtype=jnp.float32) * 0.1
    w2 = jax.random.normal(kw2, (K, A), dtype=jnp.float32) * 0.1

    # One-time parameter prep (transpose + bf16 + hop padding), off the hot path.
    w1t, w2k = prepare_params(w1, w2)

    out = attention_0(x, w1t, w2k, K)
    out = jax.block_until_ready(out)

    ref = attention_0_ref(x, w1, w2)
    assert out.shape == (B, S, K)
    # bf16 MXU inputs (f32 accumulate) vs f32 reference -> loose element tolerance.
    assert jnp.allclose(out, ref, atol=1e-2, rtol=1e-2), "mismatch vs reference"
    # Normalization is now exact: softmax over the seq axis sums to 1.
    assert jnp.allclose(jnp.sum(out, axis=1), 1.0, atol=1e-4)

    print("KERNEL_OK")
</pallas_src>

<mosaic_0001>
module attributes {stable_mosaic.version = 11 : i64} {
  func.func @_attention_kernel(%arg0: i32, %arg1: memref<8x32xf32, #tpu.memory_space<vmem>>, %arg2: memref<32x16xbf16, #tpu.memory_space<vmem>>, %arg3: memref<8x16xbf16, #tpu.memory_space<vmem>>, %arg4: memref<1x8x8xf32, #tpu.memory_space<vmem>>) attributes {dimension_semantics = [#tpu.dimension_semantics<parallel>], iteration_bounds = array<i64: 2>, scalar_prefetch = 0 : i64, scratch_operands = 0 : i64, tpu.core_type = #tpu.core_type<tc>, window_params = [{transform_indices = @transform_0, window_bounds = array<i64: 8, 32>}, {pipeline_mode = #tpu.pipeline_mode<synchronous>, transform_indices = @transform_1, window_bounds = array<i64: 32, 16>}, {pipeline_mode = #tpu.pipeline_mode<synchronous>, transform_indices = @transform_2, window_bounds = array<i64: 8, 16>}, {transform_indices = @transform_3, window_bounds = array<i64: 1, 8, 8>}]} {
    %c0 = arith.constant 0 : index
    %c0_0 = arith.constant 0 : index
    %0 = vector.load %arg1[%c0, %c0_0] : memref<8x32xf32, #tpu.memory_space<vmem>>, vector<8x32xf32>
    %1 = arith.truncf %0 : vector<8x32xf32> to vector<8x32xbf16>
    %c0_1 = arith.constant 0 : index
    %c0_2 = arith.constant 0 : index
    %2 = vector.load %arg2[%c0_1, %c0_2] : memref<32x16xbf16, #tpu.memory_space<vmem>>, vector<32x16xbf16>
    %cst = arith.constant dense<0.000000e+00> : vector<8x16xf32>
    %3 = tpu.matmul %1, %2, %cst {dimension_numbers = #tpu.dot_dimension_numbers<[1], [0], [0], [1], [0, 0, 1, 1], [], []>} : vector<8x32xbf16>, vector<32x16xbf16>, vector<8x16xf32> -> vector<8x16xf32>
    %4 = math.tanh %3 : vector<8x16xf32>
    %5 = arith.truncf %4 : vector<8x16xf32> to vector<8x16xbf16>
    %c0_3 = arith.constant 0 : index
    %c0_4 = arith.constant 0 : index
    %6 = vector.load %arg3[%c0_3, %c0_4] : memref<8x16xbf16, #tpu.memory_space<vmem>>, vector<8x16xbf16>
    %7 = tpu.transpose %6, [1, 0] : vector<8x16xbf16> -> vector<16x8xbf16>
    %cst_5 = arith.constant dense<0.000000e+00> : vector<8x8xf32>
    %8 = tpu.matmul %5, %7, %cst_5 {dimension_numbers = #tpu.dot_dimension_numbers<[1], [0], [0], [1], [0, 0, 1, 1], [], []>} : vector<8x16xbf16>, vector<16x8xbf16>, vector<8x8xf32> -> vector<8x8xf32>
    %9 = vector.shape_cast %8 : vector<8x8xf32> to vector<1x8x8xf32>
    %10 = tpu.transpose %9, [0, 2, 1] : vector<1x8x8xf32> -> vector<1x8x8xf32>
    %cst_6 = arith.constant dense<0xFF800000> : vector<1x8xf32>
    %11 = vector.multi_reduction <maximumf>, %10, %cst_6 [2] : vector<1x8x8xf32> to vector<1x8xf32>
    %12 = vector.shape_cast %11 : vector<1x8xf32> to vector<1x8x1xf32>
    %13 = vector.broadcast %12 : vector<1x8x1xf32> to vector<1x8x8xf32>
    %14 = arith.subf %10, %13 : vector<1x8x8xf32>
    %15 = math.exp %14 : vector<1x8x8xf32>
    %cst_7 = arith.constant dense<0.000000e+00> : vector<1x8xf32>
    %16 = vector.multi_reduction <add>, %15, %cst_7 [2] : vector<1x8x8xf32> to vector<1x8xf32>
    %17 = vector.shape_cast %16 : vector<1x8xf32> to vector<1x8x1xf32>
    %18 = vector.broadcast %17 : vector<1x8x1xf32> to vector<1x8x8xf32>
    %19 = arith.divf %15, %18 : vector<1x8x8xf32>
    %c0_8 = arith.constant 0 : index
    %c0_9 = arith.constant 0 : index
    %c0_10 = arith.constant 0 : index
    %20 = vector.load %arg4[%c0_8, %c0_9, %c0_10] : memref<1x8x8xf32, #tpu.memory_space<vmem>>, vector<1x8x8xf32>
    tpu.vector_store %arg4[%c0_8, %c0_9, %c0_10], %19 {strides = array<i32>} : memref<1x8x8xf32, #tpu.memory_space<vmem>>, vector<1x8x8xf32>,
    return
  }
  func.func @transform_0(%arg0: i32) -> (i32, i32) {
    %c0_i32 = arith.constant 0 : i32
    %c0_i32_0 = arith.constant 0 : i32
    return %arg0, %c0_i32 : i32, i32
  }
  func.func @transform_1(%arg0: i32) -> (i32, i32) {
    %c0_i32 = arith.constant 0 : i32
    %c0_i32_0 = arith.constant 0 : i32
    %c0_i32_1 = arith.constant 0 : i32
    return %c0_i32, %c0_i32_0 : i32, i32
  }
  func.func @transform_2(%arg0: i32) -> (i32, i32) {
    %c0_i32 = arith.constant 0 : i32
    %c0_i32_0 = arith.constant 0 : i32
    %c0_i32_1 = arith.constant 0 : i32
    return %c0_i32, %c0_i32_0 : i32, i32
  }
  func.func @transform_3(%arg0: i32) -> (i32, i32, i32) {
    %c0_i32 = arith.constant 0 : i32
    %c0_i32_0 = arith.constant 0 : i32
    %c0_i32_1 = arith.constant 0 : i32
    return %arg0, %c0_i32, %c0_i32_0 : i32, i32, i32
  }
}

</mosaic_0001>

<llo_original>
// kernel: tpu_custom_call.1
$region0: #{tpu_custom_call.1}
  #allocation0 [shape = 'u32[]', space=smem, size = 0x4, offset = 0x4, fixed_abs, tag = 'smem constant byte address 0x4 - core index']
  #allocation1 [shape = 'u32[144,128]{1,0:T(1,128)}', space=vmem, size = 0x12000, scoped, tag = 'internal scratch']
  %s0 = inlined_call_operand.vmem [shape: f32[16,32], index: 0, kind: input, shape index: {}]
  %s1 = inlined_call_operand.vmem [shape: bf16[32,16], index: 1, kind: input, shape index: {}]
  %s2 = inlined_call_operand.vmem [shape: bf16[8,16], index: 2, kind: input, shape index: {}]
  %s3 = inlined_call_operand.hbm [shape: f32[2,8,8], index: 3, kind: output, shape index: {}]
  %s4 = sld [smem:[#allocation0]]
  $region45: #{tpu_custom_call.1} parent=0
    _
  %s6 = ssub.s32 1, %s4
  %s7 = scalar_select 0, %s6, %s4
  $region1: #{tpu_custom_call.1} parent=0
    #allocation2 [shape = 'u8[8192]{0}', space=vmem, size = 0x2000, scoped, tag = 'output window, operand 0']
    #allocation3 [shape = 's32[2]{0}', space=sflag, size = 0x8, scoped, tag = 'scoped memory for tpu_custom_call.1']
    %8 = vsyncpa [#allocation3], 0
    %s9 = scalar_lea.sflag [#allocation3], 1
    %10 = vsyncpa %s9, 0
    loop: start=0, step=1, limit=4
    $region2: #{tpu_custom_call.1} parent=1 // loop_pre_header
      _
    $region3: #{tpu_custom_call.1} parent=1 // loop_header
      %s12 = sphi 0, %s16
      %p13 = scmp.ge.s32.totalorder %s12, 4
      %s22 = sphi 0, %s24
      %s25 = sphi 0, %s22
      %s26 = sphi 0, %s25
      %s42 = sphi 0, %s26
      %s46 = sphi 0, %s46
      %s48 = sphi 0, %s46
      %s49 = sphi 0, %s48
      %s63 = sphi 0, %s49
      %s67 = sphi 0, %s67
      %s69 = sphi 0, %s67
      %s70 = sphi 0, %s69
      %s84 = sphi 0, %s70
      %s90 = sphi 0, %s92
      %s93 = sphi 0, %s90
      %s94 = sphi 0, %s93
      %s110 = sphi 0, %s94
    $region4: #{tpu_custom_call.1} parent=1 // loop_header_branch
      %15 = sbr.rel (%p13) target = $region8
    $region5: #{tpu_custom_call.1} parent=1 // loop_body
      %s17 = ssub.s32 %s12, 1
      %s18 = ssub.s32 %s12, 2
      %s19 = sadd.s32 %s12, 1
      %s20 = ssub.s32 %s12, %s19
      %p21 = scmp.eq.s32.totalorder %s20, 0
      %s23 = sadd.s32 %s22, 1
      %s24 = scalar_select %p21, %s22, %s23
      %p27 = pneg %p21
      %p28 = scmp.eq.s32.totalorder %s12, 1
      %p29 = por %p27, %p28
      %p30 = scmp.ne.s32.totalorder %s22, %s25
      %p31 = scmp.eq.s32.totalorder %s12, 0
      %p32 = por %p30, %p31
      %p33 = scmp.ne.s32.totalorder %s22, %s25
      %p34 = scmp.eq.s32.totalorder %s17, 1
      %p35 = por %p33, %p34
      %p36 = scmp.ne.s32.totalorder %s25, %s26
      %p37 = scmp.eq.s32.totalorder %s17, 0
      %p38 = por %p36, %p37
      %p39 = scmp.ne.s32.totalorder %s25, %s26
      %p40 = scmp.eq.s32.totalorder %s18, 1
      %p41 = por %p39, %p40
      %p43 = scmp.ne.s32.totalorder %s26, %s42
      %p44 = scmp.eq.s32.totalorder %s18, 0
      %p45 = por %p43, %p44
      %s47 = sadd.s32 %s46, 1
      %p50 = scmp.eq.s32.totalorder %s12, 1
      %p51 = scmp.ne.s32.totalorder %s46, %s48
      %p52 = scmp.eq.s32.totalorder %s12, 0
      %p53 = por %p51, %p52
      %p54 = scmp.ne.s32.totalorder %s46, %s48
      %p55 = scmp.eq.s32.totalorder %s17, 1
      %p56 = por %p54, %p55
      %p57 = scmp.ne.s32.totalorder %s48, %s49
      %p58 = scmp.eq.s32.totalorder %s17, 0
      %p59 = por %p57, %p58
      %p60 = scmp.ne.s32.totalorder %s48, %s49
      %p61 = scmp.eq.s32.totalorder %s18, 1
      %p62 = por %p60, %p61
      %p64 = scmp.ne.s32.totalorder %s49, %s63
      %p65 = scmp.eq.s32.totalorder %s18, 0
      %p66 = por %p64, %p65
      %s68 = sadd.s32 %s67, 1
      %p71 = scmp.eq.s32.totalorder %s12, 1
      %p72 = scmp.ne.s32.totalorder %s67, %s69
      %p73 = scmp.eq.s32.totalorder %s12, 0
      %p74 = por %p72, %p73
      %p75 = scmp.ne.s32.totalorder %s67, %s69
      %p76 = scmp.eq.s32.totalorder %s17, 1
      %p77 = por %p75, %p76
      %p78 = scmp.ne.s32.totalorder %s69, %s70
      %p79 = scmp.eq.s32.totalorder %s17, 0
      %p80 = por %p78, %p79
      %p81 = scmp.ne.s32.totalorder %s69, %s70
      %p82 = scmp.eq.s32.totalorder %s18, 1
      %p83 = por %p81, %p82
      %p85 = scmp.ne.s32.totalorder %s70, %s84
      %p86 = scmp.eq.s32.totalorder %s18, 0
      %p87 = por %p85, %p86
      %s88 = ssub.s32 %s12, %s19
      %p89 = scmp.eq.s32.totalorder %s88, 0
      %s91 = sadd.s32 %s90, 1
      %s92 = scalar_select %p89, %s90, %s91
      %p95 = pneg %p89
      %p96 = scmp.eq.s32.totalorder %s12, 1
      %p97 = por %p95, %p96
      %p98 = scmp.ne.s32.totalorder %s90, %s93
      %p99 = scmp.eq.s32.totalorder %s12, 0
      %p100 = por %p98, %p99
      %p101 = scmp.ne.s32.totalorder %s90, %s93
      %p102 = scmp.eq.s32.totalorder %s17, 1
      %p103 = por %p101, %p102
      %p104 = scmp.ne.s32.totalorder %s93, %s94
      %p105 = scmp.eq.s32.totalorder %s17, 0
      %p106 = por %p104, %p105
      %p107 = scmp.ne.s32.totalorder %s93, %s94
      %p108 = scmp.eq.s32.totalorder %s18, 1
      %p109 = por %p107, %p108
      %p111 = scmp.ne.s32.totalorder %s94, %s110
      %p112 = scmp.eq.s32.totalorder %s18, 0
      %p113 = por %p111, %p112
      %p114 = scmp.le.s32.totalorder 1, %s12
      %p115 = scmp.lt.s32.totalorder %s12, 3
      %p116 = pnand %p114, %p115
      %p117 = pneg %p116
      // Predicated region
      $region9: #{tpu_custom_call.1} parent=5 // pred_check
        _
      $region10: #{tpu_custom_call.1} parent=5 // pred_check_branch
        %119 = sbr.rel (%p116) target = $region12
      $region11: #{tpu_custom_call.1} parent=5 // pred_region
        %s120 = ssub.s32 %s12, 1
        // Predicated region
        $region13: #{tpu_custom_call.1} parent=11 // pred_check
          %p121 = pneg %p59
        $region14: #{tpu_custom_call.1} parent=11 // pred_check_branch
          %123 = sbr.rel (%p121) target = $region16
        $region15: #{tpu_custom_call.1} parent=11 // pred_region
          _
        $region16: #{tpu_custom_call.1} parent=11 // pred_fallthru
          _
        // Predicated region
        $region17: #{tpu_custom_call.1} parent=11 // pred_check
          %p124 = pneg %p80
        $region18: #{tpu_custom_call.1} parent=11 // pred_check_branch
          %126 = sbr.rel (%p124) target = $region20
        $region19: #{tpu_custom_call.1} parent=11 // pred_region
          _
        $region20: #{tpu_custom_call.1} parent=11 // pred_fallthru
          _
      $region12: #{tpu_custom_call.1} parent=5 // pred_fallthru
        _
      %p127 = scmp.lt.s32.totalorder %s12, 2
      // Predicated region
      $region21: #{tpu_custom_call.1} parent=5 // pred_check
        %p128 = pneg %p127
      $region22: #{tpu_custom_call.1} parent=5 // pred_check_branch
        %130 = sbr.rel (%p128) target = $region24
      $region23: #{tpu_custom_call.1} parent=5 // pred_region
        // Predicated region
        $region25: #{tpu_custom_call.1} parent=23 // pred_check
          %p131 = pneg %p32
        $region26: #{tpu_custom_call.1} parent=23 // pred_check_branch
          %133 = sbr.rel (%p131) target = $region28
        $region27: #{tpu_custom_call.1} parent=23 // pred_region
          %p134 = scmp.lt.s32.totalorder %s12, 1
          %s135 = scalar_select %p134, %s12, 1
          %s136 = smul.addr %s135, 8
          %s137 = scalar_lea.vmem %s0, %s136
        $region28: #{tpu_custom_call.1} parent=23 // pred_fallthru
          _
      $region24: #{tpu_custom_call.1} parent=5 // pred_fallthru
        _
      %p138 = scmp.le.s32.totalorder 1, %s12
      %p139 = scmp.lt.s32.totalorder %s12, 3
      %p140 = pnand %p138, %p139
      %p141 = pneg %p140
      // Predicated region
      $region29: #{tpu_custom_call.1} parent=5 // pred_check
        _
      $region30: #{tpu_custom_call.1} parent=5 // pred_check_branch
        %143 = sbr.rel (%p140) target = $region32
      $region31: #{tpu_custom_call.1} parent=5 // pred_region
        %s144 = ssub.s32 %s12, 1
        %p145 = scmp.lt.s32.totalorder %s17, 1
        %s146 = scalar_select %p145, %s17, 1
        %s147 = smul.addr %s146, 8
        %s148 = scalar_lea.vmem %s0, %s147
        %p149 = pneg %p38
        %p150 = pneg %p35
        %p151 = pneg %p59
        %p152 = pneg %p56
        %p153 = pneg %p80
        %p154 = pneg %p77
        %p155 = pneg %p106
        %p156 = pneg %p103
        %s157 = sand.u32 %s93, 1
        %s158 = scalar_lea.sflag [#allocation3], %s157
        %s159 = sand.u32 %s93, 1
        %s160 = smul.addr %s159, 8
        %s161 = scalar_lea.vmem [#allocation2], %s160
        %p162 = scmp.lt.s32.totalorder %s17, 1
        %s163 = scalar_select %p162, %s17, 1
        %s164 = smul.addr %s163, 8
        %s165 = scalar_lea.vmem %s0, %s164
        %v167 = vld [vmem:[%s165] sm:$0xff]
        %v168 = vpack.c.bf16 %v167, %v167
        %v169 = vld [vmem:[%s1] sm:$0xf]
        %v170 = vld [vmem:[%s1 + $0x4] sm:$0xf]
        %v171 = vld [vmem:[%s1 + $0x8] sm:$0xf]
        %v172 = vld [vmem:[%s1 + $0xc] sm:$0xf]
        %v177 = vunpack.c.l.b16 %v169
        %v178 = vunpack.c.l.b16 %v170
        %v179 = vunpack.c.l.b16 %v171
        %v180 = vunpack.c.l.b16 %v172
        %v181 = vpack.c.b16 %v178, %v177
        %v182 = vpack.c.b16 %v180, %v179
        %vm185 = vcmask 261120
        %v187 = vsel %vm185, %v168, 0
        %189 = vmatprep.subr.bf16.mxu0 0
        %190 = vmatpush1.bf16.msra.mxu0 %v181
        %191 = vmatprep.subr.bf16.mxu0 0
        %192 = vmatpush1.bf16.msra.mxu0 %v182
        %193 = vmatprep.subr.bf16.mxu0 0
        %194 = vmatpush1.bf16.msra.mxu0 0
        %195 = vmatprep.subr.bf16.mxu0 0
        %196 = vmatpush1.bf16.msra.mxu0 0
        %197 = vmatprep.subr.bf16.mxu0 0
        %198 = vmatpush1.bf16.msra.mxu0 0
        %199 = vmatprep.subr.bf16.mxu0 0
        %200 = vmatpush1.bf16.msra.mxu0 0
        %201 = vmatprep.subr.bf16.mxu0 0
        %202 = vmatpush1.bf16.msra.mxu0 0
        %203 = vmatprep.subr.bf16.mxu0 0
        %204 = vmatpush1.bf16.msra.mxu0 0
        %205 = vmatprep.subr.bf16.mxu0 0
        %206 = vmatpush1.bf16.msra.mxu0 0
        %207 = vmatprep.subr.bf16.mxu0 0
        %208 = vmatpush1.bf16.msra.mxu0 0
        %209 = vmatprep.subr.bf16.mxu0 0
        %210 = vmatpush1.bf16.msra.mxu0 0
        %211 = vmatprep.subr.bf16.mxu0 0
        %212 = vmatpush1.bf16.msra.mxu0 0
        %213 = vmatprep.subr.bf16.mxu0 0
        %214 = vmatpush1.bf16.msra.mxu0 0
        %215 = vmatprep.subr.bf16.mxu0 0
        %216 = vmatpush1.bf16.msra.mxu0 0
        %217 = vmatprep.subr.bf16.mxu0 0
        %218 = vmatpush1.bf16.msra.mxu0 0
        %219 = vmatprep.subr.bf16.mxu0 0
        %220 = vmatpush1.bf16.msra.mxu0 0
        %221 = vmatprep.mubr.bf16.mxu0 0
        %222 = vmatmul.mubr.bf16.gmra.mrb[0].mxu0 %v187
        %v223 = vpop.f32.mrb[0].mxu0
        %v224 = vadd.f32 0.0, %v223
        %v225 = vpop.f32.mrb[0].mxu0
        %v226 = vpop.f32.mrb[0].mxu0
        %v227 = vpop.f32.mrb[0].mxu0
        %228 = vdwg.mxu0
        %v229 = vtanh.pop %v224
        %v230 = vpack.c.bf16 %v229, %v229
        %v231 = vld [vmem:[%s2] sm:$0xf]
        %vm232 = vcmask 130048
        %v234 = vsel %vm232, %v230, 0
        %v237 = vsel %vm232, %v231, 0
        %239 = vmatprep.subr.bf16.mxu0 0
        %240 = vmatpush1.bf16.xpose.msra.mxu0 %v237
        %241 = vmatprep.subr.bf16.mxu0 0
        %242 = vmatpush1.bf16.xpose.msra.mxu0 0
        %243 = vmatprep.subr.bf16.mxu0 0
        %244 = vmatpush1.bf16.xpose.msra.mxu0 0
        %245 = vmatprep.subr.bf16.mxu0 0
        %246 = vmatpush1.bf16.xpose.msra.mxu0 0
        %247 = vmatprep.subr.bf16.mxu0 0
        %248 = vmatpush1.bf16.xpose.msra.mxu0 0
        %249 = vmatprep.subr.bf16.mxu0 0
        %250 = vmatpush1.bf16.xpose.msra.mxu0 0
        %251 = vmatprep.subr.bf16.mxu0 0
        %252 = vmatpush1.bf16.xpose.msra.mxu0 0
        %253 = vmatprep.subr.bf16.mxu0 0
        %254 = vmatpush1.bf16.xpose.msra.mxu0 0
        %255 = vmatprep.subr.bf16.mxu0 0
        %256 = vmatpush1.bf16.xpose.msra.mxu0 0
        %257 = vmatprep.subr.bf16.mxu0 0
        %258 = vmatpush1.bf16.xpose.msra.mxu0 0
        %259 = vmatprep.subr.bf16.mxu0 0
        %260 = vmatpush1.bf16.xpose.msra.mxu0 0
        %261 = vmatprep.subr.bf16.mxu0 0
        %262 = vmatpush1.bf16.xpose.msra.mxu0 0
        %263 = vmatprep.subr.bf16.mxu0 0
        %264 = vmatpush1.bf16.xpose.msra.mxu0 0
        %265 = vmatprep.subr.bf16.mxu0 0
        %266 = vmatpush1.bf16.xpose.msra.mxu0 0
        %267 = vmatprep.subr.bf16.mxu0 0
        %268 = vmatpush1.bf16.xpose.msra.mxu0 0
        %269 = vmatprep.subr.bf16.mxu0 0
        %270 = vmatpush1.bf16.xpose.msra.mxu0 0
        %271 = vmatprep.mubr.bf16.mxu0 0
        %272 = vmatmul.mubr.bf16.gmra.mrb[0].mxu0 %v234
        %v273 = vpop.f32.mrb[0].mxu0
        %v274 = vadd.f32 0.0, %v273
        %v275 = vpop.f32.mrb[0].mxu0
        %v276 = vpop.f32.mrb[0].mxu0
        %v277 = vpop.f32.mrb[0].mxu0
        %278 = vdwg.mxu0
        %279 = vxpose.xlu0.b32.start [1/16] %v274, 128
        %280 = vxpose.xlu0.b32.cont [2/16] 0.0, 128
        %281 = vxpose.xlu0.b32.cont [3/16] 0.0, 128
        %282 = vxpose.xlu0.b32.cont [4/16] 0.0, 128
        %283 = vxpose.xlu0.b32.cont [5/16] 0.0, 128
        %284 = vxpose.xlu0.b32.cont [6/16] 0.0, 128
        %285 = vxpose.xlu0.b32.cont [7/16] 0.0, 128
        %286 = vxpose.xlu0.b32.cont [8/16] 0.0, 128
        %287 = vxpose.xlu0.b32.cont [9/16] 0.0, 128
        %288 = vxpose.xlu0.b32.cont [10/16] 0.0, 128
        %289 = vxpose.xlu0.b32.cont [11/16] 0.0, 128
        %290 = vxpose.xlu0.b32.cont [12/16] 0.0, 128
        %291 = vxpose.xlu0.b32.cont [13/16] 0.0, 128
        %292 = vxpose.xlu0.b32.cont [14/16] 0.0, 128
        %293 = vxpose.xlu0.b32.cont [15/16] 0.0, 128
        %294 = vxpose.xlu0.b32.end [16/16] 0.0, 128
        %v295 = vpop.trf.xlu0
        %v296 = vpop.trf.xlu0
        %v297 = vpop.trf.xlu0
        %v298 = vpop.trf.xlu0
        %v299 = vpop.trf.xlu0
        %v300 = vpop.trf.xlu0
        %v301 = vpop.trf.xlu0
        %v302 = vpop.trf.xlu0
        %v303 = vpop.trf.xlu0
        %v304 = vpop.trf.xlu0
        %v305 = vpop.trf.xlu0
        %v306 = vpop.trf.xlu0
        %v307 = vpop.trf.xlu0
        %v308 = vpop.trf.xlu0
        %v309 = vpop.trf.xlu0
        %v310 = vpop.trf.xlu0
        %vm311 = vcmask 64512
        %v312 = vsel %vm311, %v295, -inf
        %313 = vmax.xlane.f32.xlu0 %v312
        %v314 = vpop.xlane.xlu0 %313
        %v315 = vsub.f32 %v295, %v314
        %v316 = vmul.f32 %v315, 1.442695
        %v317 = vpow.pop %v316
        %v318 = vsel %vm311, %v317, 0.0
        %319 = vadd.xlane.f32.xlu0 %v318
        %v320 = vpop.xlane.xlu0 %319
        %v321 = vrcp.pop %v320
        %v322 = vmul.f32 %v317, %v321
        %323 = vst.msk [vmem:[%s161] sm:$0xff] %vm311, %v322
        %s324 = sand.u32 %s93, 1
        %s325 = scalar_lea.sflag [#allocation3], %s324
        %s326 = sand.u32 %s93, 1
        %s327 = smul.addr %s326, 8
        %s328 = scalar_lea.vmem [#allocation2], %s327
        // Predicated region
        $region33: #{tpu_custom_call.1} parent=31 // pred_check
          %p329 = pneg %p103
        $region34: #{tpu_custom_call.1} parent=31 // pred_check_branch
          %331 = sbr.rel (%p329) target = $region36
        $region35: #{tpu_custom_call.1} parent=31 // pred_region
          %s333 = ssub.s32 128, 128
          %334 = vsyncadd %s325, %s333
          %s335 = smul.addr %s17, 128
          %s336 = scalar_lea.hbm %s3, %s335
          %s338 = sshll.u32 %s328, 4
          %s339 = int_to_ptr.vmem [resolvable:$true] %s338
          %341 = dma.vmem_to_hbm [thread:$0]  %s339, 128, %s336, %s325
        $region36: #{tpu_custom_call.1} parent=31 // pred_fallthru
          _
      $region32: #{tpu_custom_call.1} parent=5 // pred_fallthru
        _
      %p342 = scmp.le.s32.totalorder 2, %s12
      // Predicated region
      $region37: #{tpu_custom_call.1} parent=5 // pred_check
        %p343 = pneg %p342
      $region38: #{tpu_custom_call.1} parent=5 // pred_check_branch
        %345 = sbr.rel (%p343) target = $region40
      $region39: #{tpu_custom_call.1} parent=5 // pred_region
        %s346 = ssub.s32 %s12, 2
        // Predicated region
        $region41: #{tpu_custom_call.1} parent=39 // pred_check
          %p347 = pneg %p109
        $region42: #{tpu_custom_call.1} parent=39 // pred_check_branch
          %349 = sbr.rel (%p347) target = $region44
        $region43: #{tpu_custom_call.1} parent=39 // pred_region
          %s350 = sand.u32 %s94, 1
          %s351 = scalar_lea.sflag [#allocation3], %s350
          %s352 = sand.u32 %s94, 1
          %s353 = smul.addr %s352, 8
          %s354 = scalar_lea.vmem [#allocation2], %s353
          %355 = dma.done %s351, 128
        $region44: #{tpu_custom_call.1} parent=39 // pred_fallthru
          _
      $region40: #{tpu_custom_call.1} parent=5 // pred_fallthru
        _
    $region6: #{tpu_custom_call.1} parent=1 // loop_footer
      %s16 = sadd.s32 1, %s12
    $region7: #{tpu_custom_call.1} parent=1 // loop_footer_branch
      %11 = sbr.rel target = $region3
    $region8: #{tpu_custom_call.1} parent=1 // loop_exit
      _
    %356 = vsyncpa [#allocation3], 1
    %s357 = scalar_lea.sflag [#allocation3], 1
    %358 = vsyncpa %s357, 1

</llo_original>
